<compile_context>
chip_gen: v6e
topology: v6e:2x2x1
jax: 0.10.0
libtpu: 0.0.40
codegen_flags: <defaults>
</compile_context>

<pallas_src>
import functools

import jax
import jax.numpy as jnp
from jax import lax
from jax.experimental import pallas as pl
from jax.experimental.pallas import tpu as pltpu


# --------------------------------------------------------------------------
# Kernel
# --------------------------------------------------------------------------
def sru_layer_kernel(*refs, time_chunk, batch, hidden_tile, fused_x):
    """One (hidden_tile, time_chunk) grid step of an SRU layer.

    fused_x=True  (n_h == 1):
        refs = (x_ref(cb, D) f32, w_ref(D, 3*th) bf16, b_ref(2, th) f32,
                h_ref(cb, th) f32, c_ref(batch, th) f32, gates(3, cb, th) f32)
        The single f32 x block supplies both the highway term and (cast
        in-kernel to bf16) the MXU operand.
    fused_x=False (n_h > 1):
        refs = (x_mm_ref(cb, D) bf16, x_hw_ref(cb, th) f32, w_ref, b_ref,
                h_ref, c_ref, gates)
    """
    if fused_x:
        x_mm_ref, w_ref, b_ref, h_ref, c_ref, gates = refs
        x_hw_ref = x_mm_ref                      # input_dim == hidden_dim, n_h == 1
    else:
        x_mm_ref, x_hw_ref, w_ref, b_ref, h_ref, c_ref, gates = refs

    th = hidden_tile
    t_idx = pl.program_id(1)

    # The c output block index (0, h) is constant along the time axis, so the
    # block stays resident in VMEM across chunks and doubles as the carry.
    @pl.when(t_idx == 0)
    def _():
        c_ref[...] = jnp.zeros_like(c_ref)

    # Per-gate MXU matmuls written straight into the gates scratch: no
    # (cb, 3*th) `u` temporary and no plane copies.  Bias + sigmoid are fused
    # onto the matmul results before the single store of each plane.
    x_mm = x_mm_ref[...]
    if x_mm.dtype != jnp.bfloat16:
        x_mm = x_mm.astype(jnp.bfloat16)         # MXU operand
    fb = b_ref[0:1, :]                           # forget-gate bias
    rb = b_ref[1:2, :]                           # reset-gate bias
    gates[0] = jnp.dot(x_mm, w_ref[:, 0 * th:1 * th],
                       preferred_element_type=jnp.float32)            # z
    gates[1] = jax.nn.sigmoid(
        jnp.dot(x_mm, w_ref[:, 1 * th:2 * th],
                preferred_element_type=jnp.float32) + fb)              # f
    gates[2] = jax.nn.sigmoid(
        jnp.dot(x_mm, w_ref[:, 2 * th:3 * th],
                preferred_element_type=jnp.float32) + rb)              # r

    def step(t, c_prev):
        off = pl.multiple_of(t * batch, batch)
        z_t = gates[0, pl.ds(off, batch), :]
        f_t = gates[1, pl.ds(off, batch), :]
        r_t = gates[2, pl.ds(off, batch), :]
        x_t = x_hw_ref[pl.ds(off, batch), :]
        # c = f*c + (1-f)*z   ==  z + f*(c - z)      (fewer VALU ops on the
        # h = r*tanh(c)+(1-r)x == x + r*(tanh(c)-x)   serial dependence chain)
        c_t = z_t + f_t * (c_prev - z_t)
        h_ref[pl.ds(off, batch), :] = x_t + r_t * (jnp.tanh(c_t) - x_t)
        return c_t

    c_final = lax.fori_loop(0, time_chunk, step, c_ref[...],
                            unroll=min(time_chunk, 8))
    c_ref[...] = c_final


# --------------------------------------------------------------------------
# Generation-aware knobs
# --------------------------------------------------------------------------
def _vmem_limit_bytes():
    """VMEM request sized for the current TPU generation (with headroom)."""
    cap = 64 * 1024 * 1024
    try:
        info = pltpu.get_tpu_info()
        cap = int(getattr(info, "vmem_capacity_bytes", cap) or cap)
    except Exception:
        pass
    if cap >= 96 * 1024 * 1024:          # v5e / v6e: 128 MiB physical VMEM
        return 100 * 1024 * 1024
    return 52 * 1024 * 1024              # v7x: 64 MiB per TensorCore


def _pick_hidden_tile(hidden_dim, input_dim=None, vmem_cap=None):
    if hidden_dim % 128 != 0:
        return hidden_dim                # small / unaligned: one tile
    if input_dim is None:
        input_dim = hidden_dim
    if vmem_cap is None:
        vmem_cap = _vmem_limit_bytes()
    # v7x (small VMEM) with big models: smaller tiles keep double-buffering alive.
    max_tile = 256 if (vmem_cap < 80 * 1024 * 1024 and input_dim >= 2048) else 512
    for th in (512, 384, 256, 128):
        if th <= max_tile and hidden_dim % th == 0 and hidden_dim // th >= 2:
            return th
    return hidden_dim


def _max_chunk_rows(input_dim, hidden_tile, vmem_budget, fused_x):
    """Largest cb = time_chunk*batch that keeps the working set in budget."""
    if fused_x:
        per_row = 2 * input_dim * 4 + input_dim * 2     # f32 x dbuf + bf16 cast temp
    else:
        per_row = 2 * input_dim * 2 + 2 * hidden_tile * 4   # bf16 x dbuf + f32 hw dbuf
    per_row += 3 * hidden_tile * 4 + 2 * hidden_tile * 4    # gates + h-out dbuf
    fixed = 2 * input_dim * 3 * hidden_tile * 2 + (4 << 20)  # W dbuf + slack
    avail = max(vmem_budget - fixed, per_row * 8)
    return int(min(max(avail // per_row, 8), 4096))


def _pick_time_chunk(seq_len, batch, max_rows):
    divisors = [d for d in range(1, seq_len + 1) if seq_len % d == 0]
    ok = [d for d in divisors if (d * batch) % 8 == 0 and d * batch <= max_rows]
    if not ok:
        return seq_len      # single chunk: full-extent block is always legal
    # Prefer an MXU/lane friendly row count (multiple of 256), else the largest.
    pref = [d for d in ok if (d * batch) % 256 == 0]
    return max(pref) if pref else max(ok)


# --------------------------------------------------------------------------
# Parameter packing (do ONCE at parameter-load time, not per forward call)
# --------------------------------------------------------------------------
def pack_sru_layer_params(weight, bias, hidden_dim, hidden_tile):
    """Re-pack the PyTorch-interleaved (D, 3H) weight.

    PyTorch column 3*h + g feeds gate g of hidden unit h.  We re-order columns
    hidden-tile-major and gate-contiguous within each tile so each (D, 3*th)
    column block is three static per-gate column slabs, and cast to bf16.
    """
    input_dim = weight.shape[0]
    assert hidden_dim % hidden_tile == 0
    n_h = hidden_dim // hidden_tile
    w = weight.reshape(input_dim, n_h, hidden_tile, 3)
    w = jnp.transpose(w, (0, 1, 3, 2)).reshape(input_dim, 3 * hidden_dim)
    w = w.astype(jnp.bfloat16)
    b = bias.reshape(2, hidden_dim).astype(jnp.float32)   # [forget; reset]
    return w, b


# --------------------------------------------------------------------------
# Wrapper: one SRU layer
# --------------------------------------------------------------------------
def sru_layer_forward(x, w_packed, b_packed, hidden_dim, *, hidden_tile,
                      time_chunk=None, vmem_limit=None):
    """Pallas-backed equivalent of SRU_Layer.forward (dropout = identity)."""
    seq_len, batch, input_dim = x.shape
    assert input_dim == hidden_dim, "SRU highway term needs input_dim == hidden_dim"

    th = hidden_tile
    assert hidden_dim % th == 0
    n_h = hidden_dim // th
    fused_x = (n_h == 1)
    if not fused_x:
        assert th % 128 == 0, "multi-tile path needs lane-aligned hidden tiles"

    if vmem_limit is None:
        vmem_limit = _vmem_limit_bytes()
    if time_chunk is None:
        max_rows = _max_chunk_rows(input_dim, th, int(0.7 * vmem_limit), fused_x)
        time_chunk = _pick_time_chunk(seq_len, batch, max_rows)
    tc = time_chunk
    assert seq_len % tc == 0
    cb = tc * batch
    sb = seq_len * batch
    assert cb % 8 == 0 or tc == seq_len, \
        "time_chunk*batch must be a multiple of 8 (or cover the full sequence)"
    n_t = seq_len // tc

    x_f32 = x.reshape(sb, input_dim).astype(jnp.float32)

    kernel = functools.partial(sru_layer_kernel, time_chunk=tc, batch=batch,
                               hidden_tile=th, fused_x=fused_x)

    if fused_x:
        inputs = (x_f32,)
        in_specs = [pl.BlockSpec((cb, input_dim), lambda h, t: (t, 0))]   # x (both uses)
        x_bytes = sb * input_dim * 4
    else:
        x_bf16 = x_f32.astype(jnp.bfloat16)       # MXU stream; halves refetched bytes
        inputs = (x_bf16, x_f32)
        in_specs = [pl.BlockSpec((cb, input_dim), lambda h, t: (t, 0)),   # x (matmul)
                    pl.BlockSpec((cb, th), lambda h, t: (t, h))]          # x (highway)
        x_bytes = n_h * sb * input_dim * 2 + sb * hidden_dim * 4
    in_specs += [
        pl.BlockSpec((input_dim, 3 * th), lambda h, t: (0, h)),           # W tile
        pl.BlockSpec((2, th), lambda h, t: (0, h)),                       # biases
    ]

    flops = 2 * sb * input_dim * 3 * hidden_dim + 10 * sb * hidden_dim
    transcendentals = 3 * sb * hidden_dim          # 2 sigmoids + 1 tanh
    bytes_accessed = (x_bytes
                      + input_dim * 3 * hidden_dim * 2    # W: once per h tile
                      + 2 * hidden_dim * 4                # biases
                      + sb * hidden_dim * 4               # h out
                      + batch * hidden_dim * 4)           # final c out

    h_flat, c = pl.pallas_call(
        kernel,
        out_shape=(
            jax.ShapeDtypeStruct((sb, hidden_dim), jnp.float32),
            jax.ShapeDtypeStruct((batch, hidden_dim), jnp.float32),
        ),
        grid_spec=pltpu.PrefetchScalarGridSpec(
            num_scalar_prefetch=0,
            grid=(n_h, n_t),                      # (parallel, arbitrary)
            in_specs=in_specs,
            out_specs=(
                pl.BlockSpec((cb, th), lambda h, t: (t, h)),       # h
                pl.BlockSpec((batch, th), lambda h, t: (0, h)),    # c (carry + output)
            ),
            scratch_shapes=[
                pltpu.VMEM((3, cb, th), jnp.float32),   # z / f / r planes
            ],
        ),
        compiler_params=pltpu.CompilerParams(
            dimension_semantics=("parallel", "arbitrary"),
            vmem_limit_bytes=int(vmem_limit),
        ),
        cost_estimate=pl.CostEstimate(
            flops=flops,
            transcendentals=transcendentals,
            bytes_accessed=bytes_accessed),
    )(*inputs, w_packed, b_packed)

    return h_flat.reshape(seq_len, batch, hidden_dim), c


def sru_forward(x, packed_layer_params, hidden_dim, *, hidden_tile, time_chunk=None):
    """Equivalent of SRU.forward: every layer is applied to the SAME input x
    (faithful to the reference PyTorch loop), last layer's output returned."""
    output = None
    for w_packed, b_packed in packed_layer_params:
        output, _ = sru_layer_forward(x, w_packed, b_packed, hidden_dim,
                                      hidden_tile=hidden_tile,
                                      time_chunk=time_chunk)
    return output


# --------------------------------------------------------------------------
# Pure-JAX reference (same math; matmul inputs rounded to bf16 to match MXU)
# --------------------------------------------------------------------------
def _sru_layer_ref(x, weight, bias, hidden_dim, matmul_dtype=jnp.float32):
    seq_len, batch, input_dim = x.shape
    xm = x.reshape(-1, input_dim).astype(matmul_dtype).astype(jnp.float32)
    wm = weight.astype(matmul_dtype).astype(jnp.float32)
    U = (xm @ wm).reshape(seq_len, batch, hidden_dim, 3)
    fb, rb = bias.reshape(2, hidden_dim)
    f = jax.nn.sigmoid(U[..., 1] + fb)
    r = jax.nn.sigmoid(U[..., 2] + rb)
    c = jnp.zeros((batch, hidden_dim), jnp.float32)
    hs = []
    for t in range(seq_len):
        c = f[t] * c + (1.0 - f[t]) * U[t, ..., 0]
        hs.append(r[t] * jnp.tanh(c) + (1.0 - r[t]) * x[t])
    return jnp.stack(hs, axis=0), c


if __name__ == "__main__":
    key = jax.random.PRNGKey(0)

    def init_layer(kw, input_dim, hidden_dim):
        # Matches SRU_Layer.__init__: weight ~ U(+-sqrt(2/input_dim)), bias = 0.
        dist_max = (2.0 / input_dim) ** 0.5
        weight = jax.random.uniform(kw, (input_dim, hidden_dim * 3),
                                    dtype=jnp.float32,
                                    minval=-dist_max, maxval=dist_max)
        bias = jnp.zeros((hidden_dim * 2,), dtype=jnp.float32)
        return weight, bias

    def run_config(key, seq_len, batch, hidden_dim, num_layers, time_chunk):
        key, kx = jax.random.split(key)
        x = jax.random.normal(kx, (seq_len, batch, hidden_dim), dtype=jnp.float32)
        hidden_tile = _pick_hidden_tile(hidden_dim, hidden_dim)
        raw_params, packed_params = [], []
        for _ in range(num_layers):
            key, kw = jax.random.split(key)
            weight, bias = init_layer(kw, hidden_dim, hidden_dim)
            raw_params.append((weight, bias))
            packed_params.append(
                pack_sru_layer_params(weight, bias, hidden_dim, hidden_tile))

        out = sru_forward(x, packed_params, hidden_dim,
                          hidden_tile=hidden_tile, time_chunk=time_chunk)
        out = jax.block_until_ready(out)

        ref_out = None
        for weight, bias in raw_params:
            ref_out, _ = _sru_layer_ref(x, weight, bias, hidden_dim,
                                        matmul_dtype=jnp.bfloat16)
        assert out.shape == (seq_len, batch, hidden_dim)
        err = float(jnp.max(jnp.abs(out - ref_out)))
        assert jnp.allclose(out, ref_out, atol=2e-3, rtol=2e-3), err
        return key

    # Config 1: single hidden tile (fused f32-x path), two time chunks so the
    #           in-output-block cell-state carry is exercised.
    key = run_config(key, seq_len=8, batch=2, hidden_dim=32,
                     num_layers=2, time_chunk=4)
    # Config 2: two hidden tiles (split-stream path, parallel hidden grid axis),
    #           auto-picked time chunk (exercises the VMEM-budget tile picker).
    key = run_config(key, seq_len=8, batch=2, hidden_dim=256,
                     num_layers=1, time_chunk=None)

    print("KERNEL_OK")
</pallas_src>

<mosaic_0001>
module attributes {stable_mosaic.version = 11 : i64} {
  func.func @sru_layer_kernel(%arg0: i32, %arg1: i32, %arg2: memref<8x32xf32, #tpu.memory_space<vmem>>, %arg3: memref<32x96xbf16, #tpu.memory_space<vmem>>, %arg4: memref<2x32xf32, #tpu.memory_space<vmem>>, %arg5: memref<8x32xf32, #tpu.memory_space<vmem>>, %arg6: memref<2x32xf32, #tpu.memory_space<vmem>>, %arg7: memref<3x8x32xf32, #tpu.memory_space<vmem>>) attributes {dimension_semantics = [#tpu.dimension_semantics<parallel>, #tpu.dimension_semantics<arbitrary>], iteration_bounds = array<i64: 1, 2>, scalar_prefetch = 0 : i64, scratch_operands = 1 : i64, tpu.core_type = #tpu.core_type<tc>, window_params = [{transform_indices = @transform_0, window_bounds = array<i64: 8, 32>}, {transform_indices = @transform_1, window_bounds = array<i64: 32, 96>}, {transform_indices = @transform_2, window_bounds = array<i64: 2, 32>}, {transform_indices = @transform_3, window_bounds = array<i64: 8, 32>}, {transform_indices = @transform_4, window_bounds = array<i64: 2, 32>}]} {
    %c0_i32 = arith.constant 0 : i32
    %0 = arith.cmpi eq, %arg1, %c0_i32 : i32
    %1 = arith.extui %0 : i1 to i32
    %c0_i32_0 = arith.constant 0 : i32
    %2 = arith.cmpi ne, %1, %c0_i32_0 : i32
    scf.if %2 {
      %cst_62 = arith.constant 0.000000e+00 : f32
      %126 = vector.broadcast %cst_62 : f32 to vector<2x32xf32>
      %c0_63 = arith.constant 0 : index
      %c0_64 = arith.constant 0 : index
      %127 = vector.load %arg6[%c0_63, %c0_64] : memref<2x32xf32, #tpu.memory_space<vmem>>, vector<2x32xf32>
      tpu.vector_store %arg6[%c0_63, %c0_64], %126 {strides = array<i32>} : memref<2x32xf32, #tpu.memory_space<vmem>>, vector<2x32xf32>,
    } else {
    }
    %c0 = arith.constant 0 : index
    %c0_1 = arith.constant 0 : index
    %3 = vector.load %arg2[%c0, %c0_1] : memref<8x32xf32, #tpu.memory_space<vmem>>, vector<8x32xf32>
    %4 = arith.truncf %3 : vector<8x32xf32> to vector<8x32xbf16>
    %c0_2 = arith.constant 0 : index
    %c0_3 = arith.constant 0 : index
    %5 = vector.load %arg4[%c0_2, %c0_3] : memref<2x32xf32, #tpu.memory_space<vmem>>, vector<1x32xf32>
    %c1 = arith.constant 1 : index
    %c0_4 = arith.constant 0 : index
    %6 = vector.load %arg4[%c1, %c0_4] : memref<2x32xf32, #tpu.memory_space<vmem>>, vector<1x32xf32>
    %c0_5 = arith.constant 0 : index
    %c0_6 = arith.constant 0 : index
    %7 = vector.load %arg3[%c0_5, %c0_6] : memref<32x96xbf16, #tpu.memory_space<vmem>>, vector<32x32xbf16>
    %cst = arith.constant dense<0.000000e+00> : vector<8x32xf32>
    %8 = tpu.matmul %4, %7, %cst {dimension_numbers = #tpu.dot_dimension_numbers<[1], [0], [0], [1], [0, 0, 1, 1], [], []>} : vector<8x32xbf16>, vector<32x32xbf16>, vector<8x32xf32> -> vector<8x32xf32>
    %c0_7 = arith.constant 0 : index
    %c0_8 = arith.constant 0 : index
    %c0_9 = arith.constant 0 : index
    %9 = vector.load %arg7[%c0_7, %c0_8, %c0_9] : memref<3x8x32xf32, #tpu.memory_space<vmem>>, vector<1x8x32xf32>
    %10 = vector.shape_cast %9 : vector<1x8x32xf32> to vector<8x32xf32>
    %11 = vector.shape_cast %8 : vector<8x32xf32> to vector<1x8x32xf32>
    tpu.vector_store %arg7[%c0_7, %c0_8, %c0_9], %11 {strides = array<i32>} : memref<3x8x32xf32, #tpu.memory_space<vmem>>, vector<1x8x32xf32>,
    %c0_10 = arith.constant 0 : index
    %c32 = arith.constant 32 : index
    %12 = vector.load %arg3[%c0_10, %c32] : memref<32x96xbf16, #tpu.memory_space<vmem>>, vector<32x32xbf16>
    %cst_11 = arith.constant dense<0.000000e+00> : vector<8x32xf32>
    %13 = tpu.matmul %4, %12, %cst_11 {dimension_numbers = #tpu.dot_dimension_numbers<[1], [0], [0], [1], [0, 0, 1, 1], [], []>} : vector<8x32xbf16>, vector<32x32xbf16>, vector<8x32xf32> -> vector<8x32xf32>
    %14 = vector.broadcast %5 : vector<1x32xf32> to vector<8x32xf32>
    %15 = arith.addf %13, %14 : vector<8x32xf32>
    %16 = arith.negf %15 : vector<8x32xf32>
    %17 = math.exp %16 : vector<8x32xf32>
    %cst_12 = arith.constant 1.000000e+00 : f32
    %18 = vector.broadcast %cst_12 : f32 to vector<8x32xf32>
    %19 = arith.addf %18, %17 : vector<8x32xf32>
    %20 = arith.divf %18, %19 : vector<8x32xf32>
    %c1_13 = arith.constant 1 : index
    %c0_14 = arith.constant 0 : index
    %c0_15 = arith.constant 0 : index
    %21 = vector.load %arg7[%c1_13, %c0_14, %c0_15] : memref<3x8x32xf32, #tpu.memory_space<vmem>>, vector<1x8x32xf32>
    %22 = vector.shape_cast %21 : vector<1x8x32xf32> to vector<8x32xf32>
    %23 = vector.shape_cast %20 : vector<8x32xf32> to vector<1x8x32xf32>
    tpu.vector_store %arg7[%c1_13, %c0_14, %c0_15], %23 {strides = array<i32>} : memref<3x8x32xf32, #tpu.memory_space<vmem>>, vector<1x8x32xf32>,
    %c0_16 = arith.constant 0 : index
    %c64 = arith.constant 64 : index
    %24 = vector.load %arg3[%c0_16, %c64] : memref<32x96xbf16, #tpu.memory_space<vmem>>, vector<32x32xbf16>
    %cst_17 = arith.constant dense<0.000000e+00> : vector<8x32xf32>
    %25 = tpu.matmul %4, %24, %cst_17 {dimension_numbers = #tpu.dot_dimension_numbers<[1], [0], [0], [1], [0, 0, 1, 1], [], []>} : vector<8x32xbf16>, vector<32x32xbf16>, vector<8x32xf32> -> vector<8x32xf32>
    %26 = vector.broadcast %6 : vector<1x32xf32> to vector<8x32xf32>
    %27 = arith.addf %25, %26 : vector<8x32xf32>
    %28 = arith.negf %27 : vector<8x32xf32>
    %29 = math.exp %28 : vector<8x32xf32>
    %cst_18 = arith.constant 1.000000e+00 : f32
    %30 = vector.broadcast %cst_18 : f32 to vector<8x32xf32>
    %31 = arith.addf %30, %29 : vector<8x32xf32>
    %32 = arith.divf %30, %31 : vector<8x32xf32>
    %c2 = arith.constant 2 : index
    %c0_19 = arith.constant 0 : index
    %c0_20 = arith.constant 0 : index
    %33 = vector.load %arg7[%c2, %c0_19, %c0_20] : memref<3x8x32xf32, #tpu.memory_space<vmem>>, vector<1x8x32xf32>
    %34 = vector.shape_cast %33 : vector<1x8x32xf32> to vector<8x32xf32>
    %35 = vector.shape_cast %32 : vector<8x32xf32> to vector<1x8x32xf32>
    tpu.vector_store %arg7[%c2, %c0_19, %c0_20], %35 {strides = array<i32>} : memref<3x8x32xf32, #tpu.memory_space<vmem>>, vector<1x8x32xf32>,
    %c0_21 = arith.constant 0 : index
    %c0_22 = arith.constant 0 : index
    %36 = vector.load %arg6[%c0_21, %c0_22] : memref<2x32xf32, #tpu.memory_space<vmem>>, vector<2x32xf32>
    %c0_i32_23 = arith.constant 0 : i32
    %c2_i32 = arith.constant 2 : i32
    %37 = arith.muli %c0_i32_23, %c2_i32 : i32
    %38 = tpu.assume_multiple %37, 2 : i32
    %c0_24 = arith.constant 0 : index
    %39 = arith.index_cast %38 : i32 to index
    %c0_25 = arith.constant 0 : index
    %40 = vector.load %arg7[%c0_24, %39, %c0_25] : memref<3x8x32xf32, #tpu.memory_space<vmem>>, vector<1x2x32xf32>
    %41 = vector.shape_cast %40 : vector<1x2x32xf32> to vector<2x32xf32>
    %c1_26 = arith.constant 1 : index
    %42 = arith.index_cast %38 : i32 to index
    %c0_27 = arith.constant 0 : index
    %43 = vector.load %arg7[%c1_26, %42, %c0_27] : memref<3x8x32xf32, #tpu.memory_space<vmem>>, vector<1x2x32xf32>
    %44 = vector.shape_cast %43 : vector<1x2x32xf32> to vector<2x32xf32>
    %c2_28 = arith.constant 2 : index
    %45 = arith.index_cast %38 : i32 to index
    %c0_29 = arith.constant 0 : index
    %46 = vector.load %arg7[%c2_28, %45, %c0_29] : memref<3x8x32xf32, #tpu.memory_space<vmem>>, vector<1x2x32xf32>
    %47 = vector.shape_cast %46 : vector<1x2x32xf32> to vector<2x32xf32>
    %48 = arith.index_cast %38 : i32 to index
    %c0_30 = arith.constant 0 : index
    %49 = vector.load %arg2[%48, %c0_30] : memref<8x32xf32, #tpu.memory_space<vmem>>, vector<2x32xf32>
    %50 = arith.subf %36, %41 : vector<2x32xf32>
    %51 = arith.mulf %44, %50 : vector<2x32xf32>
    %52 = arith.addf %41, %51 : vector<2x32xf32>
    %53 = math.tanh %52 : vector<2x32xf32>
    %54 = arith.subf %53, %49 : vector<2x32xf32>
    %55 = arith.mulf %47, %54 : vector<2x32xf32>
    %56 = arith.addf %49, %55 : vector<2x32xf32>
    %57 = arith.index_cast %38 : i32 to index
    %c0_31 = arith.constant 0 : index
    %58 = vector.load %arg5[%57, %c0_31] : memref<8x32xf32, #tpu.memory_space<vmem>>, vector<2x32xf32>
    tpu.vector_store %arg5[%57, %c0_31], %56 {strides = array<i32>} : memref<8x32xf32, #tpu.memory_space<vmem>>, vector<2x32xf32>,
    %c1_i32 = arith.constant 1 : i32
    %c2_i32_32 = arith.constant 2 : i32
    %59 = arith.muli %c1_i32, %c2_i32_32 : i32
    %60 = tpu.assume_multiple %59, 2 : i32
    %c0_33 = arith.constant 0 : index
    %61 = arith.index_cast %60 : i32 to index
    %c0_34 = arith.constant 0 : index
    %62 = vector.load %arg7[%c0_33, %61, %c0_34] : memref<3x8x32xf32, #tpu.memory_space<vmem>>, vector<1x2x32xf32>
    %63 = vector.shape_cast %62 : vector<1x2x32xf32> to vector<2x32xf32>
    %c1_35 = arith.constant 1 : index
    %64 = arith.index_cast %60 : i32 to index
    %c0_36 = arith.constant 0 : index
    %65 = vector.load %arg7[%c1_35, %64, %c0_36] : memref<3x8x32xf32, #tpu.memory_space<vmem>>, vector<1x2x32xf32>
    %66 = vector.shape_cast %65 : vector<1x2x32xf32> to vector<2x32xf32>
    %c2_37 = arith.constant 2 : index
    %67 = arith.index_cast %60 : i32 to index
    %c0_38 = arith.constant 0 : index
    %68 = vector.load %arg7[%c2_37, %67, %c0_38] : memref<3x8x32xf32, #tpu.memory_space<vmem>>, vector<1x2x32xf32>
    %69 = vector.shape_cast %68 : vector<1x2x32xf32> to vector<2x32xf32>
    %70 = arith.index_cast %60 : i32 to index
    %c0_39 = arith.constant 0 : index
    %71 = vector.load %arg2[%70, %c0_39] : memref<8x32xf32, #tpu.memory_space<vmem>>, vector<2x32xf32>
    %72 = arith.subf %52, %63 : vector<2x32xf32>
    %73 = arith.mulf %66, %72 : vector<2x32xf32>
    %74 = arith.addf %63, %73 : vector<2x32xf32>
    %75 = math.tanh %74 : vector<2x32xf32>
    %76 = arith.subf %75, %71 : vector<2x32xf32>
    %77 = arith.mulf %69, %76 : vector<2x32xf32>
    %78 = arith.addf %71, %77 : vector<2x32xf32>
    %79 = arith.index_cast %60 : i32 to index
    %c0_40 = arith.constant 0 : index
    %80 = vector.load %arg5[%79, %c0_40] : memref<8x32xf32, #tpu.memory_space<vmem>>, vector<2x32xf32>
    tpu.vector_store %arg5[%79, %c0_40], %78 {strides = array<i32>} : memref<8x32xf32, #tpu.memory_space<vmem>>, vector<2x32xf32>,
    %c2_i32_41 = arith.constant 2 : i32
    %c2_i32_42 = arith.constant 2 : i32
    %81 = arith.muli %c2_i32_41, %c2_i32_42 : i32
    %82 = tpu.assume_multiple %81, 2 : i32
    %c0_43 = arith.constant 0 : index
    %83 = arith.index_cast %82 : i32 to index
    %c0_44 = arith.constant 0 : index
    %84 = vector.load %arg7[%c0_43, %83, %c0_44] : memref<3x8x32xf32, #tpu.memory_space<vmem>>, vector<1x2x32xf32>
    %85 = vector.shape_cast %84 : vector<1x2x32xf32> to vector<2x32xf32>
    %c1_45 = arith.constant 1 : index
    %86 = arith.index_cast %82 : i32 to index
    %c0_46 = arith.constant 0 : index
    %87 = vector.load %arg7[%c1_45, %86, %c0_46] : memref<3x8x32xf32, #tpu.memory_space<vmem>>, vector<1x2x32xf32>
    %88 = vector.shape_cast %87 : vector<1x2x32xf32> to vector<2x32xf32>
    %c2_47 = arith.constant 2 : index
    %89 = arith.index_cast %82 : i32 to index
    %c0_48 = arith.constant 0 : index
    %90 = vector.load %arg7[%c2_47, %89, %c0_48] : memref<3x8x32xf32, #tpu.memory_space<vmem>>, vector<1x2x32xf32>
    %91 = vector.shape_cast %90 : vector<1x2x32xf32> to vector<2x32xf32>
    %92 = arith.index_cast %82 : i32 to index
    %c0_49 = arith.constant 0 : index
    %93 = vector.load %arg2[%92, %c0_49] : memref<8x32xf32, #tpu.memory_space<vmem>>, vector<2x32xf32>
    %94 = arith.subf %74, %85 : vector<2x32xf32>
    %95 = arith.mulf %88, %94 : vector<2x32xf32>
    %96 = arith.addf %85, %95 : vector<2x32xf32>
    %97 = math.tanh %96 : vector<2x32xf32>
    %98 = arith.subf %97, %93 : vector<2x32xf32>
    %99 = arith.mulf %91, %98 : vector<2x32xf32>
    %100 = arith.addf %93, %99 : vector<2x32xf32>
    %101 = arith.index_cast %82 : i32 to index
    %c0_50 = arith.constant 0 : index
    %102 = vector.load %arg5[%101, %c0_50] : memref<8x32xf32, #tpu.memory_space<vmem>>, vector<2x32xf32>
    tpu.vector_store %arg5[%101, %c0_50], %100 {strides = array<i32>} : memref<8x32xf32, #tpu.memory_space<vmem>>, vector<2x32xf32>,
    %c3_i32 = arith.constant 3 : i32
    %c2_i32_51 = arith.constant 2 : i32
    %103 = arith.muli %c3_i32, %c2_i32_51 : i32
    %104 = tpu.assume_multiple %103, 2 : i32
    %c0_52 = arith.constant 0 : index
    %105 = arith.index_cast %104 : i32 to index
    %c0_53 = arith.constant 0 : index
    %106 = vector.load %arg7[%c0_52, %105, %c0_53] : memref<3x8x32xf32, #tpu.memory_space<vmem>>, vector<1x2x32xf32>
    %107 = vector.shape_cast %106 : vector<1x2x32xf32> to vector<2x32xf32>
    %c1_54 = arith.constant 1 : index
    %108 = arith.index_cast %104 : i32 to index
    %c0_55 = arith.constant 0 : index
    %109 = vector.load %arg7[%c1_54, %108, %c0_55] : memref<3x8x32xf32, #tpu.memory_space<vmem>>, vector<1x2x32xf32>
    %110 = vector.shape_cast %109 : vector<1x2x32xf32> to vector<2x32xf32>
    %c2_56 = arith.constant 2 : index
    %111 = arith.index_cast %104 : i32 to index
    %c0_57 = arith.constant 0 : index
    %112 = vector.load %arg7[%c2_56, %111, %c0_57] : memref<3x8x32xf32, #tpu.memory_space<vmem>>, vector<1x2x32xf32>
    %113 = vector.shape_cast %112 : vector<1x2x32xf32> to vector<2x32xf32>
    %114 = arith.index_cast %104 : i32 to index
    %c0_58 = arith.constant 0 : index
    %115 = vector.load %arg2[%114, %c0_58] : memref<8x32xf32, #tpu.memory_space<vmem>>, vector<2x32xf32>
    %116 = arith.subf %96, %107 : vector<2x32xf32>
    %117 = arith.mulf %110, %116 : vector<2x32xf32>
    %118 = arith.addf %107, %117 : vector<2x32xf32>
    %119 = math.tanh %118 : vector<2x32xf32>
    %120 = arith.subf %119, %115 : vector<2x32xf32>
    %121 = arith.mulf %113, %120 : vector<2x32xf32>
    %122 = arith.addf %115, %121 : vector<2x32xf32>
    %123 = arith.index_cast %104 : i32 to index
    %c0_59 = arith.constant 0 : index
    %124 = vector.load %arg5[%123, %c0_59] : memref<8x32xf32, #tpu.memory_space<vmem>>, vector<2x32xf32>
    tpu.vector_store %arg5[%123, %c0_59], %122 {strides = array<i32>} : memref<8x32xf32, #tpu.memory_space<vmem>>, vector<2x32xf32>,
    %c4_i32 = arith.constant 4 : i32
    %c0_60 = arith.constant 0 : index
    %c0_61 = arith.constant 0 : index
    %125 = vector.load %arg6[%c0_60, %c0_61] : memref<2x32xf32, #tpu.memory_space<vmem>>, vector<2x32xf32>
    tpu.vector_store %arg6[%c0_60, %c0_61], %118 {strides = array<i32>} : memref<2x32xf32, #tpu.memory_space<vmem>>, vector<2x32xf32>,
    return
  }
  func.func @transform_0(%arg0: i32, %arg1: i32) -> (i32, i32) {
    %c0_i32 = arith.constant 0 : i32
    %c0_i32_0 = arith.constant 0 : i32
    return %arg1, %c0_i32 : i32, i32
  }
  func.func @transform_1(%arg0: i32, %arg1: i32) -> (i32, i32) {
    %c0_i32 = arith.constant 0 : i32
    %c0_i32_0 = arith.constant 0 : i32
    return %c0_i32, %arg0 : i32, i32
  }
  func.func @transform_2(%arg0: i32, %arg1: i32) -> (i32, i32) {
    %c0_i32 = arith.constant 0 : i32
    %c0_i32_0 = arith.constant 0 : i32
    return %c0_i32, %arg0 : i32, i32
  }
  func.func @transform_3(%arg0: i32, %arg1: i32) -> (i32, i32) {
    %c0_i32 = arith.constant 0 : i32
    return %arg1, %arg0 : i32, i32
  }
  func.func @transform_4(%arg0: i32, %arg1: i32) -> (i32, i32) {
    %c0_i32 = arith.constant 0 : i32
    %c0_i32_0 = arith.constant 0 : i32
    return %c0_i32, %arg0 : i32, i32
  }
}

</mosaic_0001>

<llo_original>
// kernel: tpu_custom_call.1
$region0: #{tpu_custom_call.1}
  #allocation0 [shape = 'u32[]', space=smem, size = 0x4, offset = 0x4, fixed_abs, tag = 'smem constant byte address 0x4 - core index']
  #allocation1 [shape = 'u32[144,128]{1,0:T(1,128)}', space=vmem, size = 0x12000, scoped, tag = 'internal scratch']
  #allocation2 [shape = 'f32[3,8,32]{2,1,0:T(8,128)}', space=vmem, size = 0x3000, scoped, tag = 'scratch operand']
  %s0 = inlined_call_operand.hbm [shape: f32[16,32], index: 0, kind: input, shape index: {}]
  %s1 = inlined_call_operand.hbm [shape: bf16[32,96], index: 1, kind: input, shape index: {}]
  %s2 = inlined_call_operand.vmem [shape: f32[2,32], index: 2, kind: input, shape index: {}]
  %s3 = inlined_call_operand.hbm [shape: f32[16,32], index: 3, kind: output, shape index: {0}]
  %s4 = inlined_call_operand.hbm [shape: f32[2,32], index: 4, kind: output, shape index: {1}]
  %5 = xla_tuple %s3, %s4
  %s6 = sld [smem:[#allocation0]]
  $region65: #{tpu_custom_call.1} parent=0
    _
  %s8 = ssub.s32 1, %s6
  %s9 = scalar_select 0, %s8, %s6
  $region1: #{tpu_custom_call.1} parent=0
    #allocation3 [shape = 'u8[8192]{0}', space=vmem, size = 0x2000, scoped, tag = 'input window, operand 0']
    #allocation4 [shape = 's32[2]{0}', space=sflag, size = 0x8, scoped, tag = 'scoped memory for tpu_custom_call.1']
    #allocation5 [shape = 's32[2]{0}', space=sflag, size = 0x8, scoped, tag = 'scoped memory for tpu_custom_call.1']
    #allocation6 [shape = 'u8[8192]{0}', space=vmem, size = 0x2000, scoped, tag = 'input window, operand 1, single buffered']
    #allocation7 [shape = 's32[1]{0}', space=sflag, size = 0x4, scoped, tag = 'scoped memory for tpu_custom_call.1']
    #allocation8 [shape = 'u8[8192]{0}', space=vmem, size = 0x2000, scoped, tag = 'output window, operand 0']
    #allocation9 [shape = 'u8[1024]{0}', space=vmem, size = 0x400, scoped, tag = 'output window, operand 1, single buffered']
    #allocation10 [shape = 's32[1]{0}', space=sflag, size = 0x4, scoped, tag = 'scoped memory for tpu_custom_call.1']
    %10 = vsyncpa [#allocation4], 0
    %s11 = scalar_lea.sflag [#allocation4], 1
    %12 = vsyncpa %s11, 0
    %13 = vsyncpa [#allocation7], 0
    %14 = vsyncpa [#allocation5], 0
    %s15 = scalar_lea.sflag [#allocation5], 1
    %16 = vsyncpa %s15, 0
    %17 = vsyncpa [#allocation10], 0
    loop: start=0, step=1, limit=4
    $region2: #{tpu_custom_call.1} parent=1 // loop_pre_header
      _
    $region3: #{tpu_custom_call.1} parent=1 // loop_header
      %s19 = sphi 0, %s23
      %p20 = scmp.ge.s32.totalorder %s19, 4
      %s26 = sphi 0, %s38
      %s27 = sphi 0, %s34
      %s28 = sphi 0, %s26
      %s29 = sphi 0, %s27
      %s30 = sphi 0, %s28
      %s31 = sphi 0, %s29
      %s41 = sphi 0, %s43
      %s44 = sphi 0, %s41
      %s45 = sphi 0, %s44
      %s61 = sphi 0, %s45
      %s67 = sphi 0, %s69
      %s70 = sphi 0, %s67
      %s71 = sphi 0, %s70
      %s87 = sphi 0, %s71
      %s93 = sphi 0, %s95
      %s96 = sphi 0, %s93
      %s97 = sphi 0, %s96
      %s113 = sphi 0, %s97
      %s121 = sphi 0, %s123
      %s124 = sphi 0, %s121
      %s125 = sphi 0, %s124
      %s141 = sphi 0, %s125
      %s147 = sphi 0, %s149
      %s150 = sphi 0, %s147
      %s151 = sphi 0, %s150
      %s167 = sphi 0, %s151
    $region4: #{tpu_custom_call.1} parent=1 // loop_header_branch
      %22 = sbr.rel (%p20) target = $region8
    $region5: #{tpu_custom_call.1} parent=1 // loop_body
      %s24 = ssub.s32 %s19, 1
      %s25 = ssub.s32 %s19, 2
      %s32 = sadd.s32 1, %s27
      %p33 = scmp.ge.s32.totalorder %s32, 2
      %s34 = scalar_select %p33, 0, %s32
      %s35 = sadd.s32 1, %s26
      %s36 = scalar_select %p33, %s35, %s26
      %p37 = scmp.ge.s32.totalorder %s36, 1
      %s38 = scalar_select %p37, 0, %s36
      %s39 = ssub.s32 %s27, %s34
      %p40 = scmp.eq.s32.totalorder %s39, 0
      %s42 = sadd.s32 %s41, 1
      %s43 = scalar_select %p40, %s41, %s42
      %p46 = pneg %p40
      %p47 = scmp.eq.s32.totalorder %s19, 1
      %p48 = por %p46, %p47
      %p49 = scmp.ne.s32.totalorder %s41, %s44
      %p50 = scmp.eq.s32.totalorder %s19, 0
      %p51 = por %p49, %p50
      %p52 = scmp.ne.s32.totalorder %s41, %s44
      %p53 = scmp.eq.s32.totalorder %s24, 1
      %p54 = por %p52, %p53
      %p55 = scmp.ne.s32.totalorder %s44, %s45
      %p56 = scmp.eq.s32.totalorder %s24, 0
      %p57 = por %p55, %p56
      %p58 = scmp.ne.s32.totalorder %s44, %s45
      %p59 = scmp.eq.s32.totalorder %s25, 1
      %p60 = por %p58, %p59
      %p62 = scmp.ne.s32.totalorder %s45, %s61
      %p63 = scmp.eq.s32.totalorder %s25, 0
      %p64 = por %p62, %p63
      %s65 = ssub.s32 %s26, %s38
      %p66 = scmp.eq.s32.totalorder %s65, 0
      %s68 = sadd.s32 %s67, 1
      %s69 = scalar_select %p66, %s67, %s68
      %p72 = pneg %p66
      %p73 = scmp.eq.s32.totalorder %s19, 1
      %p74 = por %p72, %p73
      %p75 = scmp.ne.s32.totalorder %s67, %s70
      %p76 = scmp.eq.s32.totalorder %s19, 0
      %p77 = por %p75, %p76
      %p78 = scmp.ne.s32.totalorder %s67, %s70
      %p79 = scmp.eq.s32.totalorder %s24, 1
      %p80 = por %p78, %p79
      %p81 = scmp.ne.s32.totalorder %s70, %s71
      %p82 = scmp.eq.s32.totalorder %s24, 0
      %p83 = por %p81, %p82
      %p84 = scmp.ne.s32.totalorder %s70, %s71
      %p85 = scmp.eq.s32.totalorder %s25, 1
      %p86 = por %p84, %p85
      %p88 = scmp.ne.s32.totalorder %s71, %s87
      %p89 = scmp.eq.s32.totalorder %s25, 0
      %p90 = por %p88, %p89
      %s91 = ssub.s32 %s26, %s38
      %p92 = scmp.eq.s32.totalorder %s91, 0
      %s94 = sadd.s32 %s93, 1
      %s95 = scalar_select %p92, %s93, %s94
      %p98 = pneg %p92
      %p99 = scmp.eq.s32.totalorder %s19, 1
      %p100 = por %p98, %p99
      %p101 = scmp.ne.s32.totalorder %s93, %s96
      %p102 = scmp.eq.s32.totalorder %s19, 0
      %p103 = por %p101, %p102
      %p104 = scmp.ne.s32.totalorder %s93, %s96
      %p105 = scmp.eq.s32.totalorder %s24, 1
      %p106 = por %p104, %p105
      %p107 = scmp.ne.s32.totalorder %s96, %s97
      %p108 = scmp.eq.s32.totalorder %s24, 0
      %p109 = por %p107, %p108
      %p110 = scmp.ne.s32.totalorder %s96, %s97
      %p111 = scmp.eq.s32.totalorder %s25, 1
      %p112 = por %p110, %p111
      %p114 = scmp.ne.s32.totalorder %s97, %s113
      %p115 = scmp.eq.s32.totalorder %s25, 0
      %p116 = por %p114, %p115
      %s117 = ssub.s32 %s27, %s34
      %s118 = ssub.s32 %s26, %s38
      %s119 = sor.u32 %s117, %s118
      %p120 = scmp.eq.s32.totalorder %s119, 0
      %s122 = sadd.s32 %s121, 1
      %s123 = scalar_select %p120, %s121, %s122
      %p126 = pneg %p120
      %p127 = scmp.eq.s32.totalorder %s19, 1
      %p128 = por %p126, %p127
      %p129 = scmp.ne.s32.totalorder %s121, %s124
      %p130 = scmp.eq.s32.totalorder %s19, 0
      %p131 = por %p129, %p130
      %p132 = scmp.ne.s32.totalorder %s121, %s124
      %p133 = scmp.eq.s32.totalorder %s24, 1
      %p134 = por %p132, %p133
      %p135 = scmp.ne.s32.totalorder %s124, %s125
      %p136 = scmp.eq.s32.totalorder %s24, 0
      %p137 = por %p135, %p136
      %p138 = scmp.ne.s32.totalorder %s124, %s125
      %p139 = scmp.eq.s32.totalorder %s25, 1
      %p140 = por %p138, %p139
      %p142 = scmp.ne.s32.totalorder %s125, %s141
      %p143 = scmp.eq.s32.totalorder %s25, 0
      %p144 = por %p142, %p143
      %s145 = ssub.s32 %s26, %s38
      %p146 = scmp.eq.s32.totalorder %s145, 0
      %s148 = sadd.s32 %s147, 1
      %s149 = scalar_select %p146, %s147, %s148
      %p152 = pneg %p146
      %p153 = scmp.eq.s32.totalorder %s19, 1
      %p154 = por %p152, %p153
      %p155 = scmp.ne.s32.totalorder %s147, %s150
      %p156 = scmp.eq.s32.totalorder %s19, 0
      %p157 = por %p155, %p156
      %p158 = scmp.ne.s32.totalorder %s147, %s150
      %p159 = scmp.eq.s32.totalorder %s24, 1
      %p160 = por %p158, %p159
      %p161 = scmp.ne.s32.totalorder %s150, %s151
      %p162 = scmp.eq.s32.totalorder %s24, 0
      %p163 = por %p161, %p162
      %p164 = scmp.ne.s32.totalorder %s150, %s151
      %p165 = scmp.eq.s32.totalorder %s25, 1
      %p166 = por %p164, %p165
      %p168 = scmp.ne.s32.totalorder %s151, %s167
      %p169 = scmp.eq.s32.totalorder %s25, 0
      %p170 = por %p168, %p169
      %p171 = scmp.le.s32.totalorder 1, %s19
      %p172 = scmp.lt.s32.totalorder %s19, 3
      %p173 = pnand %p171, %p172
      %p174 = pneg %p173
      // Predicated region
      $region9: #{tpu_custom_call.1} parent=5 // pred_check
        _
      $region10: #{tpu_custom_call.1} parent=5 // pred_check_branch
        %176 = sbr.rel (%p173) target = $region12
      $region11: #{tpu_custom_call.1} parent=5 // pred_region
        %s177 = ssub.s32 %s19, 1
        // Predicated region
        $region13: #{tpu_custom_call.1} parent=11 // pred_check
          %p178 = pneg %p83
        $region14: #{tpu_custom_call.1} parent=11 // pred_check_branch
          %180 = sbr.rel (%p178) target = $region16
        $region15: #{tpu_custom_call.1} parent=11 // pred_region
          %s182 = ssub.s32 256, 256
          %183 = vsyncadd [#allocation7], %s182
          %s184 = smul.addr %s28, 64
          %s185 = scalar_lea.hbm %s1, %s184
          %s186 = sshll.u32 [#allocation6], 4
          %s187 = int_to_ptr.vmem [resolvable:$true] %s186
          %192 = dma.hbm_to_vmem [thread:$0]  %s185, 256, %s187, [#allocation7], 64, 64, 4
        $region16: #{tpu_custom_call.1} parent=11 // pred_fallthru
          _
        // Predicated region
        $region17: #{tpu_custom_call.1} parent=11 // pred_check
          %p193 = pneg %p109
        $region18: #{tpu_custom_call.1} parent=11 // pred_check_branch
          %195 = sbr.rel (%p193) target = $region20
        $region19: #{tpu_custom_call.1} parent=11 // pred_region
          %p196 = scmp.lt.s32.totalorder %s28, 0
          %s197 = scalar_select %p196, %s28, 0
          %s198 = smul.addr %s197, 2
          %s199 = scalar_lea.vmem %s2, %s198
        $region20: #{tpu_custom_call.1} parent=11 // pred_fallthru
          _
      $region12: #{tpu_custom_call.1} parent=5 // pred_fallthru
        _
      %p200 = scmp.lt.s32.totalorder %s19, 2
      // Predicated region
      $region21: #{tpu_custom_call.1} parent=5 // pred_check
        %p201 = pneg %p200
      $region22: #{tpu_custom_call.1} parent=5 // pred_check_branch
        %203 = sbr.rel (%p201) target = $region24
      $region23: #{tpu_custom_call.1} parent=5 // pred_region
        // Predicated region
        $region25: #{tpu_custom_call.1} parent=23 // pred_check
          %p204 = pneg %p51
        $region26: #{tpu_custom_call.1} parent=23 // pred_check_branch
          %206 = sbr.rel (%p204) target = $region28
        $region27: #{tpu_custom_call.1} parent=23 // pred_region
          %s207 = sand.u32 %s41, 1
          %s208 = scalar_lea.sflag [#allocation4], %s207
          %s209 = sand.u32 %s41, 1
          %s210 = smul.addr %s209, 8
          %s211 = scalar_lea.vmem [#allocation3], %s210
          %s213 = ssub.s32 128, 128
          %214 = vsyncadd %s208, %s213
          %s215 = smul.addr %s27, 128
          %s216 = scalar_lea.hbm %s0, %s215
          %s218 = sshll.u32 %s211, 4
          %s219 = int_to_ptr.vmem [resolvable:$true] %s218
          %221 = dma.hbm_to_vmem [thread:$0]  %s216, 128, %s219, %s208
        $region28: #{tpu_custom_call.1} parent=23 // pred_fallthru
          _
      $region24: #{tpu_custom_call.1} parent=5 // pred_fallthru
        _
      %p222 = scmp.le.s32.totalorder 1, %s19
      %p223 = scmp.lt.s32.totalorder %s19, 3
      %p224 = pnand %p222, %p223
      %p225 = pneg %p224
      // Predicated region
      $region29: #{tpu_custom_call.1} parent=5 // pred_check
        _
      $region30: #{tpu_custom_call.1} parent=5 // pred_check_branch
        %227 = sbr.rel (%p224) target = $region32
      $region31: #{tpu_custom_call.1} parent=5 // pred_region
        %s228 = ssub.s32 %s19, 1
        %s229 = sand.u32 %s44, 1
        %s230 = scalar_lea.sflag [#allocation4], %s229
        %s231 = sand.u32 %s44, 1
        %s232 = smul.addr %s231, 8
        %s233 = scalar_lea.vmem [#allocation3], %s232
        // Predicated region
        $region33: #{tpu_custom_call.1} parent=31 // pred_check
          %p234 = pneg %p57
        $region34: #{tpu_custom_call.1} parent=31 // pred_check_branch
          %236 = sbr.rel (%p234) target = $region36
        $region35: #{tpu_custom_call.1} parent=31 // pred_region
          %237 = dma.done %s230, 128
        $region36: #{tpu_custom_call.1} parent=31 // pred_fallthru
          _
        // Predicated region
        $region37: #{tpu_custom_call.1} parent=31 // pred_check
          %p238 = pneg %p83
        $region38: #{tpu_custom_call.1} parent=31 // pred_check_branch
          %240 = sbr.rel (%p238) target = $region40
        $region39: #{tpu_custom_call.1} parent=31 // pred_region
          %241 = dma.done [#allocation7], 256
        $region40: #{tpu_custom_call.1} parent=31 // pred_fallthru
          _
        %s242 = sand.u32 %s44, 1
        %s243 = scalar_lea.sflag [#allocation4], %s242
        %s244 = sand.u32 %s44, 1
        %s245 = smul.addr %s244, 8
        %s246 = scalar_lea.vmem [#allocation3], %s245
        %p247 = pneg %p57
        %p248 = pneg %p54
        %p249 = pneg %p83
        %p250 = pneg %p80
        %p251 = scmp.lt.s32.totalorder %s28, 0
        %s252 = scalar_select %p251, %s28, 0
        %s253 = smul.addr %s252, 2
        %s254 = scalar_lea.vmem %s2, %s253
        %p255 = pneg %p109
        %p256 = pneg %p106
        %p257 = pneg %p137
        %p258 = pneg %p134
        %s259 = sand.u32 %s124, 1
        %s260 = scalar_lea.sflag [#allocation5], %s259
        %s261 = sand.u32 %s124, 1
        %s262 = smul.addr %s261, 8
        %s263 = scalar_lea.vmem [#allocation8], %s262
        %p264 = pneg %p163
        %p265 = pneg %p160
        %p266 = scmp.lt.s32.totalorder %s28, 0
        %s267 = scalar_select %p266, %s28, 0
        %s268 = smul.addr %s267, 2
        %s269 = scalar_lea.vmem %s2, %s268
        %p271 = scmp.eq.s32.totalorder %s29, 0
        // Predicated region
        $region41: #{tpu_custom_call.1} parent=31 // pred_check
          %p272 = pneg %p271
        $region42: #{tpu_custom_call.1} parent=31 // pred_check_branch
          %274 = sbr.rel (%p272) target = $region44
        $region43: #{tpu_custom_call.1} parent=31 // pred_region
          %vm275 = vcmask 254976
          %276 = vst.msk [vmem:[#allocation9] sm:$0x3] %vm275, 0.0
        $region44: #{tpu_custom_call.1} parent=31 // pred_fallthru
          _
        %v277 = vld [vmem:[%s233] sm:$0xff]
        %v278 = vpack.c.bf16 %v277, %v277
        %v279 = vld [vmem:[%s269] sm:$0x1]
        %v280 = vld [vmem:[%s269 + $0x1] sm:$0x1]
        %v281 = vld [vmem:[#allocation6] sm:$0xf]
        %v282 = vld [vmem:[#allocation6 + $0x4] sm:$0xf]
        %v283 = vld [vmem:[#allocation6 + $0x8] sm:$0xf]
        %v284 = vld [vmem:[#allocation6 + $0xc] sm:$0xf]
        %v289 = vunpack.c.l.b16 %v281
        %v290 = vunpack.c.l.b16 %v282
        %v291 = vunpack.c.l.b16 %v283
        %v292 = vunpack.c.l.b16 %v284
        %v293 = vpack.c.b16 %v290, %v289
        %v294 = vpack.c.b16 %v292, %v291
        %vm297 = vcmask 261120
        %v299 = vsel %vm297, %v278, 0
        %301 = vmatprep.subr.bf16.mxu0 0
        %302 = vmatpush1.bf16.msra.mxu0 0
        %303 = vmatprep.subr.bf16.mxu0 0
        %304 = vmatpush1.bf16.msra.mxu0 0
        %305 = vmatprep.subr.bf16.mxu0 0
        %306 = vmatpush1.bf16.msra.mxu0 0
        %307 = vmatprep.subr.bf16.mxu0 0
        %308 = vmatpush1.bf16.msra.mxu0 0
        %309 = vmatprep.subr.bf16.mxu0 0
        %310 = vmatpush1.bf16.msra.mxu0 0
        %311 = vmatprep.subr.bf16.mxu0 0
        %312 = vmatpush1.bf16.msra.mxu0 0
        %313 = vmatprep.subr.bf16.mxu0 0
        %314 = vmatpush1.bf16.msra.mxu0 %v294
        %315 = vmatprep.subr.bf16.mxu0 0
        %316 = vmatpush1.bf16.msra.mxu0 %v293
        %317 = vmatprep.subr.bf16.mxu0 0
        %318 = vmatpush2.bf16.msra.mxu0 0
        %319 = vmatprep.subr.bf16.mxu0 0
        %320 = vmatpush2.bf16.msra.mxu0 0
        %321 = vmatprep.subr.bf16.mxu0 0
        %322 = vmatpush2.bf16.msra.mxu0 0
        %323 = vmatprep.subr.bf16.mxu0 0
        %324 = vmatpush2.bf16.msra.mxu0 0
        %325 = vmatprep.subr.bf16.mxu0 0
        %326 = vmatpush2.bf16.msra.mxu0 0
        %327 = vmatprep.subr.bf16.mxu0 0
        %328 = vmatpush2.bf16.msra.mxu0 0
        %329 = vmatprep.subr.bf16.mxu0 0
        %330 = vmatpush2.bf16.msra.mxu0 0
        %331 = vmatprep.subr.bf16.mxu0 0
        %332 = vmatpush2.bf16.msra.mxu0 0
        %333 = vmatprep.mubr.bf16.mxu0 0
        %334 = vmatmul.mubr.bf16.gmra.mxu0 %v299
        %v335 = vpop.f32.mrf.mxu0
        %v336 = vadd.f32 0.0, %v335
        %v337 = vpop.f32.mrf.mxu0
        %v338 = vpop.f32.mrf.mxu0
        %v339 = vpop.f32.mrf.mxu0
        %340 = vdwg.mxu0
        %341 = vst.msk [vmem:[#allocation2] sm:$0xff] %vm297, %v336
        %v342 = vld [vmem:[#allocation6] sm:$0xf]
        %v343 = vld [vmem:[#allocation6 + $0x4] sm:$0xf]
        %v344 = vld [vmem:[#allocation6 + $0x8] sm:$0xf]
        %v345 = vld [vmem:[#allocation6 + $0xc] sm:$0xf]
        %v346 = vlaneseq
        %v347 = vshrl.u32 %v346, 7
        %v348 = vsub.s32 0, %v347
        %v349 = vrot.slane %v279, %v348
        %v354 = vunpack.c.l.b16 %v342
        %v355 = vunpack.c.l.b16 %v343
        %v356 = vunpack.c.l.b16 %v344
        %v357 = vunpack.c.l.b16 %v345
        %v358 = vpack.c.b16 %v355, %v354
        %v359 = vpack.c.b16 %v357, %v356
        %360 = vrot.lane.b32.xlu0 %v358, 96
        %v361 = vpop.permute.xlu0 %360
        %362 = vrot.lane.b32.xlu0 %v359, 96
        %v363 = vpop.permute.xlu0 %362
        %366 = vmatprep.subr.bf16.mxu0 0
        %367 = vmatpush1.bf16.msra.mxu0 0
        %368 = vmatprep.subr.bf16.mxu0 0
        %369 = vmatpush1.bf16.msra.mxu0 0
        %370 = vmatprep.subr.bf16.mxu0 0
        %371 = vmatpush1.bf16.msra.mxu0 0
        %372 = vmatprep.subr.bf16.mxu0 0
        %373 = vmatpush1.bf16.msra.mxu0 0
        %374 = vmatprep.subr.bf16.mxu0 0
        %375 = vmatpush1.bf16.msra.mxu0 0
        %376 = vmatprep.subr.bf16.mxu0 0
        %377 = vmatpush1.bf16.msra.mxu0 0
        %378 = vmatprep.subr.bf16.mxu0 0
        %379 = vmatpush1.bf16.msra.mxu0 %v363
        %380 = vmatprep.subr.bf16.mxu0 0
        %381 = vmatpush1.bf16.msra.mxu0 %v361
        %382 = vmatprep.subr.bf16.mxu0 0
        %383 = vmatpush2.bf16.msra.mxu0 0
        %384 = vmatprep.subr.bf16.mxu0 0
        %385 = vmatpush2.bf16.msra.mxu0 0
        %386 = vmatprep.subr.bf16.mxu0 0
        %387 = vmatpush2.bf16.msra.mxu0 0
        %388 = vmatprep.subr.bf16.mxu0 0
        %389 = vmatpush2.bf16.msra.mxu0 0
        %390 = vmatprep.subr.bf16.mxu0 0
        %391 = vmatpush2.bf16.msra.mxu0 0
        %392 = vmatprep.subr.bf16.mxu0 0
        %393 = vmatpush2.bf16.msra.mxu0 0
        %394 = vmatprep.subr.bf16.mxu0 0
        %395 = vmatpush2.bf16.msra.mxu0 0
        %396 = vmatprep.subr.bf16.mxu0 0
        %397 = vmatpush2.bf16.msra.mxu0 0
        %398 = vmatprep.mubr.bf16.mxu0 0
        %399 = vmatmul.mubr.bf16.gmra.mxu0 %v299
        %v400 = vpop.f32.mrf.mxu0
        %v401 = vadd.f32 %v349, %v400
        %v402 = vpop.f32.mrf.mxu0
        %v403 = vpop.f32.mrf.mxu0
        %v404 = vpop.f32.mrf.mxu0
        %405 = vdwg.mxu0
        %v406 = vxor.u32 %v401, 2147483648
        %v407 = vmul.f32 %v406, 1.442695
        %v408 = vpow.pop %v407
        %v409 = vadd.f32 %v408, 1.0
        %v410 = vrcp.pop %v409
        %v411 = vmul.f32 1.0, %v410
        %s412 = scalar_lea.vmem [#allocation2], 8
        %413 = vst.msk [vmem:[%s412] sm:$0xff] %vm297, %v411
        %v414 = vld [vmem:[#allocation6] sm:$0xf]
        %v415 = vld [vmem:[#allocation6 + $0x4] sm:$0xf]
        %v416 = vld [vmem:[#allocation6 + $0x8] sm:$0xf]
        %v417 = vld [vmem:[#allocation6 + $0xc] sm:$0xf]
        %v418 = vlaneseq
        %v419 = vshrl.u32 %v418, 7
        %v420 = vsub.s32 0, %v419
        %v421 = vrot.slane %v280, %v420
        %v426 = vunpack.c.l.b16 %v414
        %v427 = vunpack.c.l.b16 %v415
        %v428 = vunpack.c.l.b16 %v416
        %v429 = vunpack.c.l.b16 %v417
        %v430 = vpack.c.b16 %v427, %v426
        %v431 = vpack.c.b16 %v429, %v428
        %432 = vrot.lane.b32.xlu0 %v430, 64
        %v433 = vpop.permute.xlu0 %432
        %434 = vrot.lane.b32.xlu0 %v431, 64
        %v435 = vpop.permute.xlu0 %434
        %438 = vmatprep.subr.bf16.mxu0 0
        %439 = vmatpush1.bf16.msra.mxu0 0
        %440 = vmatprep.subr.bf16.mxu0 0
        %441 = vmatpush1.bf16.msra.mxu0 0
        %442 = vmatprep.subr.bf16.mxu0 0
        %443 = vmatpush1.bf16.msra.mxu0 0
        %444 = vmatprep.subr.bf16.mxu0 0
        %445 = vmatpush1.bf16.msra.mxu0 0
        %446 = vmatprep.subr.bf16.mxu0 0
        %447 = vmatpush1.bf16.msra.mxu0 0
        %448 = vmatprep.subr.bf16.mxu0 0
        %449 = vmatpush1.bf16.msra.mxu0 0
        %450 = vmatprep.subr.bf16.mxu0 0
        %451 = vmatpush1.bf16.msra.mxu0 %v435
        %452 = vmatprep.subr.bf16.mxu0 0
        %453 = vmatpush1.bf16.msra.mxu0 %v433
        %454 = vmatprep.subr.bf16.mxu0 0
        %455 = vmatpush2.bf16.msra.mxu0 0
        %456 = vmatprep.subr.bf16.mxu0 0
        %457 = vmatpush2.bf16.msra.mxu0 0
        %458 = vmatprep.subr.bf16.mxu0 0
        %459 = vmatpush2.bf16.msra.mxu0 0
        %460 = vmatprep.subr.bf16.mxu0 0
        %461 = vmatpush2.bf16.msra.mxu0 0
        %462 = vmatprep.subr.bf16.mxu0 0
        %463 = vmatpush2.bf16.msra.mxu0 0
        %464 = vmatprep.subr.bf16.mxu0 0
        %465 = vmatpush2.bf16.msra.mxu0 0
        %466 = vmatprep.subr.bf16.mxu0 0
        %467 = vmatpush2.bf16.msra.mxu0 0
        %468 = vmatprep.subr.bf16.mxu0 0
        %469 = vmatpush2.bf16.msra.mxu0 0
        %470 = vmatprep.mubr.bf16.mxu0 0
        %471 = vmatmul.mubr.bf16.gmra.mxu0 %v299
        %v472 = vpop.f32.mrf.mxu0
        %v473 = vadd.f32 %v421, %v472
        %v474 = vpop.f32.mrf.mxu0
        %v475 = vpop.f32.mrf.mxu0
        %v476 = vpop.f32.mrf.mxu0
        %477 = vdwg.mxu0
        %v478 = vxor.u32 %v473, 2147483648
        %v479 = vmul.f32 %v478, 1.442695
        %v480 = vpow.pop %v479
        %v481 = vadd.f32 %v480, 1.0
        %v482 = vrcp.pop %v481
        %v483 = vmul.f32 1.0, %v482
        %s484 = scalar_lea.vmem [#allocation2], 16
        %485 = vst.msk [vmem:[%s484] sm:$0xff] %vm297, %v483
        %v486 = vld [vmem:[#allocation9] sm:$0x3]
        %v487 = vld [vmem:[#allocation2] sm:$0x3]
        %s488 = sadd.s32 0, 8
        %s489 = scalar_lea.vmem [#allocation2], %s488
        %v490 = vld [vmem:[%s489] sm:$0x3]
        %s491 = sadd.s32 0, 16
        %s492 = scalar_lea.vmem [#allocation2], %s491
        %v493 = vld [vmem:[%s492] sm:$0x3]
        %v494 = vld [vmem:[%s233] sm:$0x3]
        %v495 = vsub.f32 %v486, %v487
        %v496 = vmul.f32 %v490, %v495
        %v497 = vadd.f32 %v487, %v496
        %v498 = vtanh.pop %v497
        %v499 = vsub.f32 %v498, %v494
        %v500 = vmul.f32 %v493, %v499
        %v501 = vadd.f32 %v494, %v500
        %vm502 = vcmask 254976
        %503 = vst.msk [vmem:[%s263] sm:$0x3] %vm502, %v501
        %s504 = scalar_lea.vmem [#allocation2], 2
        %v505 = vld [vmem:[%s504] sm:$0x3]
        %s506 = sadd.s32 2, 8
        %s507 = scalar_lea.vmem [#allocation2], %s506
        %v508 = vld [vmem:[%s507] sm:$0x3]
        %s509 = sadd.s32 2, 16
        %s510 = scalar_lea.vmem [#allocation2], %s509
        %v511 = vld [vmem:[%s510] sm:$0x3]
        %s512 = scalar_lea.vmem %s233, 2 [#allocation3]
        %v513 = vld [vmem:[%s512] sm:$0x3]
        %v514 = vsub.f32 %v497, %v505
        %v515 = vmul.f32 %v508, %v514
        %v516 = vadd.f32 %v505, %v515
        %v517 = vtanh.pop %v516
        %v518 = vsub.f32 %v517, %v513
        %v519 = vmul.f32 %v511, %v518
        %v520 = vadd.f32 %v513, %v519
        %s521 = scalar_lea.vmem %s263, 2 [#allocation8]
        %522 = vst.msk [vmem:[%s521] sm:$0x3] %vm502, %v520
        %s523 = scalar_lea.vmem [#allocation2], 4
        %v524 = vld [vmem:[%s523] sm:$0x3]
        %s525 = sadd.s32 4, 8
        %s526 = scalar_lea.vmem [#allocation2], %s525
        %v527 = vld [vmem:[%s526] sm:$0x3]
        %s528 = sadd.s32 4, 16
        %s529 = scalar_lea.vmem [#allocation2], %s528
        %v530 = vld [vmem:[%s529] sm:$0x3]
        %s531 = scalar_lea.vmem %s233, 4 [#allocation3]
        %v532 = vld [vmem:[%s531] sm:$0x3]
        %v533 = vsub.f32 %v516, %v524
        %v534 = vmul.f32 %v527, %v533
        %v535 = vadd.f32 %v524, %v534
        %v536 = vtanh.pop %v535
        %v537 = vsub.f32 %v536, %v532
        %v538 = vmul.f32 %v530, %v537
        %v539 = vadd.f32 %v532, %v538
        %s540 = scalar_lea.vmem %s263, 4 [#allocation8]
        %541 = vst.msk [vmem:[%s540] sm:$0x3] %vm502, %v539
        %s542 = scalar_lea.vmem [#allocation2], 6
        %v543 = vld [vmem:[%s542] sm:$0x3]
        %s544 = sadd.s32 6, 8
        %s545 = scalar_lea.vmem [#allocation2], %s544
        %v546 = vld [vmem:[%s545] sm:$0x3]
        %s547 = sadd.s32 6, 16
        %s548 = scalar_lea.vmem [#allocation2], %s547
        %v549 = vld [vmem:[%s548] sm:$0x3]
        %s550 = scalar_lea.vmem %s233, 6 [#allocation3]
        %v551 = vld [vmem:[%s550] sm:$0x3]
        %v552 = vsub.f32 %v535, %v543
        %v553 = vmul.f32 %v546, %v552
        %v554 = vadd.f32 %v543, %v553
        %v555 = vtanh.pop %v554
        %v556 = vsub.f32 %v555, %v551
        %v557 = vmul.f32 %v549, %v556
        %v558 = vadd.f32 %v551, %v557
        %s559 = scalar_lea.vmem %s263, 6 [#allocation8]
        %560 = vst.msk [vmem:[%s559] sm:$0x3] %vm502, %v558
        %561 = vst.msk [vmem:[#allocation9] sm:$0x3] %vm502, %v554
        %s562 = sand.u32 %s124, 1
        %s563 = scalar_lea.sflag [#allocation5], %s562
        %s564 = sand.u32 %s124, 1
        %s565 = smul.addr %s564, 8
        %s566 = scalar_lea.vmem [#allocation8], %s565
        // Predicated region
        $region45: #{tpu_custom_call.1} parent=31 // pred_check
          %p567 = pneg %p134
        $region46: #{tpu_custom_call.1} parent=31 // pred_check_branch
          %569 = sbr.rel (%p567) target = $region48
        $region47: #{tpu_custom_call.1} parent=31 // pred_region
          %s571 = ssub.s32 128, 128
          %572 = vsyncadd %s563, %s571
          %s573 = sadd.s32 %s28, %s29
          %s574 = smul.addr %s573, 128
          %s575 = scalar_lea.hbm %s3, %s574
          %s577 = sshll.u32 %s566, 4
          %s578 = int_to_ptr.vmem [resolvable:$true] %s577
          %580 = dma.vmem_to_hbm [thread:$0]  %s578, 128, %s575, %s563
        $region48: #{tpu_custom_call.1} parent=31 // pred_fallthru
          _
        // Predicated region
        $region49: #{tpu_custom_call.1} parent=31 // pred_check
          %p581 = pneg %p160
        $region50: #{tpu_custom_call.1} parent=31 // pred_check_branch
          %583 = sbr.rel (%p581) target = $region52
        $region51: #{tpu_custom_call.1} parent=31 // pred_region
          %s585 = ssub.s32 32, 32
          %586 = vsyncadd [#allocation10], %s585
          %s587 = smul.addr %s28, 32
          %s588 = scalar_lea.hbm %s4, %s587
          %s590 = sshll.u32 [#allocation9], 4
          %s591 = int_to_ptr.vmem [resolvable:$true] %s590
          %593 = dma.vmem_to_hbm [thread:$0]  %s591, 32, %s588, [#allocation10]
        $region52: #{tpu_custom_call.1} parent=31 // pred_fallthru
          _
        // Predicated region
        $region53: #{tpu_custom_call.1} parent=31 // pred_check
          %p594 = pneg %p160
        $region54: #{tpu_custom_call.1} parent=31 // pred_check_branch
          %596 = sbr.rel (%p594) target = $region56
        $region55: #{tpu_custom_call.1} parent=31 // pred_region
          %597 = dma.done [#allocation10], 32
        $region56: #{tpu_custom_call.1} parent=31 // pred_fallthru
          _
      $region32: #{tpu_custom_call.1} parent=5 // pred_fallthru
        _
      %p598 = scmp.le.s32.totalorder 2, %s19
      // Predicated region
      $region57: #{tpu_custom_call.1} parent=5 // pred_check
        %p599 = pneg %p598
      $region58: #{tpu_custom_call.1} parent=5 // pred_check_branch
        %601 = sbr.rel (%p599) target = $region60
      $region59: #{tpu_custom_call.1} parent=5 // pred_region
        %s602 = ssub.s32 %s19, 2
        // Predicated region
        $region61: #{tpu_custom_call.1} parent=59 // pred_check
          %p603 = pneg %p140
        $region62: #{tpu_custom_call.1} parent=59 // pred_check_branch
          %605 = sbr.rel (%p603) target = $region64
        $region63: #{tpu_custom_call.1} parent=59 // pred_region
          %s606 = sand.u32 %s125, 1
          %s607 = scalar_lea.sflag [#allocation5], %s606
          %s608 = sand.u32 %s125, 1
          %s609 = smul.addr %s608, 8
          %s610 = scalar_lea.vmem [#allocation8], %s609
          %611 = dma.done %s607, 128
        $region64: #{tpu_custom_call.1} parent=59 // pred_fallthru
          _
      $region60: #{tpu_custom_call.1} parent=5 // pred_fallthru
        _
    $region6: #{tpu_custom_call.1} parent=1 // loop_footer
      %s23 = sadd.s32 1, %s19
    $region7: #{tpu_custom_call.1} parent=1 // loop_footer_branch
      %18 = sbr.rel target = $region3
    $region8: #{tpu_custom_call.1} parent=1 // loop_exit
      _
    %612 = vsyncpa [#allocation4], 1
    %s613 = scalar_lea.sflag [#allocation4], 1
    %614 = vsyncpa %s613, 1
    %615 = vsyncpa [#allocation7], 1
    %616 = vsyncpa [#allocation5], 1
    %s617 = scalar_lea.sflag [#allocation5], 1
    %618 = vsyncpa %s617, 1
    %619 = vsyncpa [#allocation10], 1

</llo_original>
